<compile_context>
chip_gen: v7x
topology: tpu7x:2x2x1
jax: 0.10.0
libtpu: 0.0.40
codegen_flags: <defaults>
</compile_context>

<pallas_src>
import math

import jax
import jax.numpy as jnp
from jax.experimental import pallas as pl
from jax.experimental.pallas import tpu as pltpu


def _gelu_exact(x):
    # PyTorch nn.GELU() default = exact (erf-based) GELU.
    inv_sqrt2 = jnp.asarray(1.0 / math.sqrt(2.0), dtype=x.dtype)
    return 0.5 * x * (1.0 + jax.lax.erf(x * inv_sqrt2))


def _make_fusion_kernel(nb):
    """Kernel for blocks: x (nb, C_in, ts), w1 (C_in, C_in), b1 (C_in, 1) f32,
    w2 (C_out, C_in), b2 (C_out, 1) f32, out (nb, C_out, ts)."""

    def kernel(x_ref, w1_ref, b1_ref, w2_ref, b2_ref, o_ref):
        w1 = w1_ref[...]
        b1 = b1_ref[...]          # f32
        w2 = w2_ref[...]
        b2 = b2_ref[...]          # f32
        # Static unroll over the (small) batch sub-block.  Ragged batch /
        # spatial tails are garbage in the padded region; their stores are
        # masked by Pallas, and the channel matmuls never mix spatial columns,
        # so garbage cannot leak into valid outputs.
        for n in range(nb):
            x = x_ref[n]                                           # (C_in, ts), native dtype
            h = jnp.dot(w1, x, preferred_element_type=jnp.float32) + b1
            g = _gelu_exact(h).astype(w2.dtype)                    # back to bf16 if compute dtype is bf16
            o = jnp.dot(w2, g, preferred_element_type=jnp.float32) + b2
            o_ref[n] = o.astype(o_ref.dtype)

    return kernel


def fusion_block(x_nchw, w1, b1, w2, b2, *, tile_s=None, batch_block=None):
    """x_nchw: [N, C_in, H, W]; w1: [C_in, C_in] (out, in); b1: [C_in];
    w2: [C_out, C_in] (out, in); b2: [C_out].  Returns [N, C_out, H, W]."""
    N, C_in, H, W = x_nchw.shape
    C_out = w2.shape[0]
    S = H * W
    cdt = x_nchw.dtype                       # compute dtype follows the input
    itemsize = jnp.dtype(cdt).itemsize

    # Channel-first view: no NCHW<->NHWC transposes, spatial axis on lanes.
    x3d = x_nchw.reshape(N, C_in, S)
    w1c = w1.astype(cdt)                     # bf16 inputs -> bf16 MXU feeds
    w2c = w2.astype(cdt)
    b1_2d = b1.reshape(C_in, 1).astype(jnp.float32)   # biases added in f32
    b2_2d = b2.reshape(C_out, 1).astype(jnp.float32)

    # --- generation-aware VMEM budget (64 MiB on v7x, 128 MiB on v5e/v6e) ---
    try:
        capacity = int(pltpu.get_tpu_info().vmem_capacity_bytes)
    except Exception:  # pragma: no cover - conservative fallback
        capacity = 64 << 20
    ceiling = min(capacity * 85 // 100, capacity - (12 << 20))

    # Resident-bytes estimate: double-buffered x/out blocks, double-buffered
    # constant weights/biases, plus the f32 intermediates (h, g, acc).
    wgt_bytes = 2 * ((C_in * C_in + C_out * C_in) * itemsize + (C_in + C_out) * 4)

    def footprint(nb_, ts_):
        io = 2 * nb_ * ts_ * (C_in + C_out) * itemsize
        tmp = nb_ * ts_ * (2 * C_in + C_out) * 4
        return io + tmp + wgt_bytes

    # --- spatial tile: as large as the generation's VMEM allows -------------
    if tile_s is None:
        tile_s = 8192 if capacity >= (96 << 20) else 4096
    tile_s = max(128, (tile_s // 128) * 128)

    ts = min(tile_s, 128 * pl.cdiv(S, 128))
    while ts > 128 and footprint(1, ts) > ceiling:
        ts = max(128, (ts // 2 // 128) * 128)
    if ts >= S:
        ts = S                    # single full-extent spatial block (any S ok)
    # Ragged spatial tail is handled by Pallas edge-block masking: no wrapper
    # pad / slice (each of those would be a full extra HBM pass).

    # --- batch sub-block: amortize ~0.35us/step overhead when traffic is tiny
    if batch_block is None:
        nb = 1
        step_bytes = ts * (C_in + C_out) * itemsize
        while (nb < N and nb < 8 and step_bytes * nb < (1 << 20)
               and footprint(2 * nb, ts) <= ceiling):
            nb *= 2
        nb = min(nb, N)
    else:
        nb = max(1, min(int(batch_block), N))

    # --- make sure >= 2 grid steps exist so both v7x TensorCores get work ---
    if pl.cdiv(N, nb) * pl.cdiv(S, ts) == 1:
        if S >= 256:
            ts = 128 * pl.cdiv(pl.cdiv(S, 2), 128)
        elif nb > 1:
            nb = (nb + 1) // 2

    grid = (pl.cdiv(N, nb), pl.cdiv(S, ts))
    vmem_limit = int(min(max(footprint(nb, ts) * 5 // 4, 32 << 20), ceiling))

    out3d = pl.pallas_call(
        _make_fusion_kernel(nb),
        out_shape=jax.ShapeDtypeStruct((N, C_out, S), cdt),
        grid_spec=pltpu.PrefetchScalarGridSpec(
            num_scalar_prefetch=0,
            grid=grid,
            in_specs=[
                pl.BlockSpec((nb, C_in, ts), lambda bi, si: (bi, 0, si)),
                pl.BlockSpec((C_in, C_in), lambda bi, si: (0, 0)),
                pl.BlockSpec((C_in, 1), lambda bi, si: (0, 0)),
                pl.BlockSpec((C_out, C_in), lambda bi, si: (0, 0)),
                pl.BlockSpec((C_out, 1), lambda bi, si: (0, 0)),
            ],
            out_specs=pl.BlockSpec((nb, C_out, ts), lambda bi, si: (bi, 0, si)),
        ),
        compiler_params=pltpu.CompilerParams(
            # Both axes independent -> shards across v7x's 2 TensorCores;
            # free on single-TC v5e/v6e.
            dimension_semantics=("parallel", "parallel"),
            vmem_limit_bytes=vmem_limit,
        ),
    )(x3d, w1c, b1_2d, w2c, b2_2d)

    return out3d.reshape(N, C_out, H, W)


def _reference(x_nchw, w1, b1, w2, b2):
    # Pure-JAX reference of the same math (1x1 convs as channel matmuls).
    N, C_in, H, W = x_nchw.shape
    C_out = w2.shape[0]
    x = x_nchw.reshape(N, C_in, H * W).astype(jnp.float32)
    h = jnp.einsum("oc,ncs->nos", w1.astype(jnp.float32), x) + b1[None, :, None]
    g = 0.5 * h * (1.0 + jax.lax.erf(h / jnp.sqrt(2.0)))
    o = jnp.einsum("oc,ncs->nos", w2.astype(jnp.float32), g) + b2[None, :, None]
    return o.reshape(N, C_out, H, W).astype(x_nchw.dtype)


if __name__ == "__main__":
    key = jax.random.PRNGKey(0)
    k_x, k_w1, k_b1, k_w2, k_b2, k_x2 = jax.random.split(key, 6)

    N, in_planes, out_planes, H, W = 2, 4, 8, 16, 16

    x = jax.random.normal(k_x, (N, in_planes, H, W), dtype=jnp.float32)

    # Parameters in PyTorch Conv2d layout: weight[out, in] (1x1 kernel squeezed),
    # same fan-in uniform-init spirit as nn.Conv2d.
    bound1 = 1.0 / math.sqrt(in_planes)
    w1 = jax.random.uniform(k_w1, (in_planes, in_planes), jnp.float32, -bound1, bound1)
    b1 = jax.random.uniform(k_b1, (in_planes,), jnp.float32, -bound1, bound1)
    w2 = jax.random.uniform(k_w2, (out_planes, in_planes), jnp.float32, -bound1, bound1)
    b2 = jax.random.uniform(k_b2, (out_planes,), jnp.float32, -bound1, bound1)

    # Test 1: default tiling (exercises the multi-batch-per-step path).
    out = jax.block_until_ready(fusion_block(x, w1, b1, w2, b2))
    ref = _reference(x, w1, b1, w2, b2)
    assert out.shape == (N, out_planes, H, W), out.shape
    assert jnp.allclose(out, ref, atol=1e-5, rtol=1e-5), float(jnp.max(jnp.abs(out - ref)))

    # Test 2: ragged spatial tail (S=400 not a multiple of 128) and ragged
    # batch block (N=3 with batch_block=2) -> exercises Pallas edge masking
    # that replaced the wrapper-side pad/slice.
    N2, H2, W2 = 3, 20, 20
    x2 = jax.random.normal(k_x2, (N2, in_planes, H2, W2), dtype=jnp.float32)
    out2 = jax.block_until_ready(
        fusion_block(x2, w1, b1, w2, b2, tile_s=128, batch_block=2))
    ref2 = _reference(x2, w1, b1, w2, b2)
    assert out2.shape == (N2, out_planes, H2, W2), out2.shape
    assert jnp.allclose(out2, ref2, atol=1e-5, rtol=1e-5), float(jnp.max(jnp.abs(out2 - ref2)))

    print("KERNEL_OK")
</pallas_src>

<mosaic_0001>
module attributes {stable_mosaic.version = 11 : i64} {
  func.func @kernel(%arg0: i32, %arg1: i32, %arg2: memref<2x4x128xf32, #tpu.memory_space<vmem>>, %arg3: memref<4x4xf32, #tpu.memory_space<vmem>>, %arg4: memref<4x1xf32, #tpu.memory_space<vmem>>, %arg5: memref<8x4xf32, #tpu.memory_space<vmem>>, %arg6: memref<8x1xf32, #tpu.memory_space<vmem>>, %arg7: memref<2x8x128xf32, #tpu.memory_space<vmem>>) attributes {dimension_semantics = [#tpu.dimension_semantics<parallel>, #tpu.dimension_semantics<parallel>], iteration_bounds = array<i64: 1, 2>, scalar_prefetch = 0 : i64, scratch_operands = 0 : i64, tpu.core_type = #tpu.core_type<tc>, window_params = [{transform_indices = @transform_0, window_bounds = array<i64: 2, 4, 128>}, {pipeline_mode = #tpu.pipeline_mode<synchronous>, transform_indices = @transform_1, window_bounds = array<i64: 4, 4>}, {pipeline_mode = #tpu.pipeline_mode<synchronous>, transform_indices = @transform_2, window_bounds = array<i64: 4, 1>}, {pipeline_mode = #tpu.pipeline_mode<synchronous>, transform_indices = @transform_3, window_bounds = array<i64: 8, 4>}, {pipeline_mode = #tpu.pipeline_mode<synchronous>, transform_indices = @transform_4, window_bounds = array<i64: 8, 1>}, {transform_indices = @transform_5, window_bounds = array<i64: 2, 8, 128>}]} {
    %c0 = arith.constant 0 : index
    %c0_0 = arith.constant 0 : index
    %0 = vector.load %arg3[%c0, %c0_0] : memref<4x4xf32, #tpu.memory_space<vmem>>, vector<4x4xf32>
    %c0_1 = arith.constant 0 : index
    %c0_2 = arith.constant 0 : index
    %1 = vector.load %arg4[%c0_1, %c0_2] : memref<4x1xf32, #tpu.memory_space<vmem>>, vector<4x1xf32>
    %c0_3 = arith.constant 0 : index
    %c0_4 = arith.constant 0 : index
    %2 = vector.load %arg5[%c0_3, %c0_4] : memref<8x4xf32, #tpu.memory_space<vmem>>, vector<8x4xf32>
    %c0_5 = arith.constant 0 : index
    %c0_6 = arith.constant 0 : index
    %3 = vector.load %arg6[%c0_5, %c0_6] : memref<8x1xf32, #tpu.memory_space<vmem>>, vector<8x1xf32>
    %c0_7 = arith.constant 0 : index
    %c0_8 = arith.constant 0 : index
    %c0_9 = arith.constant 0 : index
    %4 = vector.load %arg2[%c0_7, %c0_8, %c0_9] : memref<2x4x128xf32, #tpu.memory_space<vmem>>, vector<1x4x128xf32>
    %5 = vector.shape_cast %4 : vector<1x4x128xf32> to vector<4x128xf32>
    %cst = arith.constant dense<0.000000e+00> : vector<4x128xf32>
    %6 = tpu.matmul %0, %5, %cst {dimension_numbers = #tpu.dot_dimension_numbers<[1], [0], [0], [1], [0, 0, 1, 1], [], []>} : vector<4x4xf32>, vector<4x128xf32>, vector<4x128xf32> -> vector<4x128xf32>
    %7 = vector.broadcast %1 : vector<4x1xf32> to vector<4x128xf32>
    %8 = arith.addf %6, %7 : vector<4x128xf32>
    %cst_10 = arith.constant 5.000000e-01 : f32
    %9 = vector.broadcast %cst_10 : f32 to vector<4x128xf32>
    %10 = arith.mulf %9, %8 : vector<4x128xf32>
    %cst_11 = arith.constant 0.707106769 : f32
    %11 = vector.broadcast %cst_11 : f32 to vector<4x128xf32>
    %12 = arith.mulf %8, %11 : vector<4x128xf32>
    %13 = math.erf %12 : vector<4x128xf32>
    %cst_12 = arith.constant 1.000000e+00 : f32
    %14 = vector.broadcast %cst_12 : f32 to vector<4x128xf32>
    %15 = arith.addf %14, %13 : vector<4x128xf32>
    %16 = arith.mulf %10, %15 : vector<4x128xf32>
    %cst_13 = arith.constant dense<0.000000e+00> : vector<8x128xf32>
    %17 = tpu.matmul %2, %16, %cst_13 {dimension_numbers = #tpu.dot_dimension_numbers<[1], [0], [0], [1], [0, 0, 1, 1], [], []>} : vector<8x4xf32>, vector<4x128xf32>, vector<8x128xf32> -> vector<8x128xf32>
    %18 = vector.broadcast %3 : vector<8x1xf32> to vector<8x128xf32>
    %19 = arith.addf %17, %18 : vector<8x128xf32>
    %c0_14 = arith.constant 0 : index
    %c0_15 = arith.constant 0 : index
    %c0_16 = arith.constant 0 : index
    %20 = vector.load %arg7[%c0_14, %c0_15, %c0_16] : memref<2x8x128xf32, #tpu.memory_space<vmem>>, vector<1x8x128xf32>
    %21 = vector.shape_cast %20 : vector<1x8x128xf32> to vector<8x128xf32>
    %22 = vector.shape_cast %19 : vector<8x128xf32> to vector<1x8x128xf32>
    tpu.vector_store %arg7[%c0_14, %c0_15, %c0_16], %22 {strides = array<i32>} : memref<2x8x128xf32, #tpu.memory_space<vmem>>, vector<1x8x128xf32>,
    %c1 = arith.constant 1 : index
    %c0_17 = arith.constant 0 : index
    %c0_18 = arith.constant 0 : index
    %23 = vector.load %arg2[%c1, %c0_17, %c0_18] : memref<2x4x128xf32, #tpu.memory_space<vmem>>, vector<1x4x128xf32>
    %24 = vector.shape_cast %23 : vector<1x4x128xf32> to vector<4x128xf32>
    %cst_19 = arith.constant dense<0.000000e+00> : vector<4x128xf32>
    %25 = tpu.matmul %0, %24, %cst_19 {dimension_numbers = #tpu.dot_dimension_numbers<[1], [0], [0], [1], [0, 0, 1, 1], [], []>} : vector<4x4xf32>, vector<4x128xf32>, vector<4x128xf32> -> vector<4x128xf32>
    %26 = vector.broadcast %1 : vector<4x1xf32> to vector<4x128xf32>
    %27 = arith.addf %25, %26 : vector<4x128xf32>
    %cst_20 = arith.constant 5.000000e-01 : f32
    %28 = vector.broadcast %cst_20 : f32 to vector<4x128xf32>
    %29 = arith.mulf %28, %27 : vector<4x128xf32>
    %cst_21 = arith.constant 0.707106769 : f32
    %30 = vector.broadcast %cst_21 : f32 to vector<4x128xf32>
    %31 = arith.mulf %27, %30 : vector<4x128xf32>
    %32 = math.erf %31 : vector<4x128xf32>
    %cst_22 = arith.constant 1.000000e+00 : f32
    %33 = vector.broadcast %cst_22 : f32 to vector<4x128xf32>
    %34 = arith.addf %33, %32 : vector<4x128xf32>
    %35 = arith.mulf %29, %34 : vector<4x128xf32>
    %cst_23 = arith.constant dense<0.000000e+00> : vector<8x128xf32>
    %36 = tpu.matmul %2, %35, %cst_23 {dimension_numbers = #tpu.dot_dimension_numbers<[1], [0], [0], [1], [0, 0, 1, 1], [], []>} : vector<8x4xf32>, vector<4x128xf32>, vector<8x128xf32> -> vector<8x128xf32>
    %37 = vector.broadcast %3 : vector<8x1xf32> to vector<8x128xf32>
    %38 = arith.addf %36, %37 : vector<8x128xf32>
    %c1_24 = arith.constant 1 : index
    %c0_25 = arith.constant 0 : index
    %c0_26 = arith.constant 0 : index
    %39 = vector.load %arg7[%c1_24, %c0_25, %c0_26] : memref<2x8x128xf32, #tpu.memory_space<vmem>>, vector<1x8x128xf32>
    %40 = vector.shape_cast %39 : vector<1x8x128xf32> to vector<8x128xf32>
    %41 = vector.shape_cast %38 : vector<8x128xf32> to vector<1x8x128xf32>
    tpu.vector_store %arg7[%c1_24, %c0_25, %c0_26], %41 {strides = array<i32>} : memref<2x8x128xf32, #tpu.memory_space<vmem>>, vector<1x8x128xf32>,
    return
  }
  func.func @transform_0(%arg0: i32, %arg1: i32) -> (i32, i32, i32) {
    %c0_i32 = arith.constant 0 : i32
    %c0_i32_0 = arith.constant 0 : i32
    return %arg0, %c0_i32, %arg1 : i32, i32, i32
  }
  func.func @transform_1(%arg0: i32, %arg1: i32) -> (i32, i32) {
    %c0_i32 = arith.constant 0 : i32
    %c0_i32_0 = arith.constant 0 : i32
    %c0_i32_1 = arith.constant 0 : i32
    return %c0_i32, %c0_i32_0 : i32, i32
  }
  func.func @transform_2(%arg0: i32, %arg1: i32) -> (i32, i32) {
    %c0_i32 = arith.constant 0 : i32
    %c0_i32_0 = arith.constant 0 : i32
    %c0_i32_1 = arith.constant 0 : i32
    return %c0_i32, %c0_i32_0 : i32, i32
  }
  func.func @transform_3(%arg0: i32, %arg1: i32) -> (i32, i32) {
    %c0_i32 = arith.constant 0 : i32
    %c0_i32_0 = arith.constant 0 : i32
    %c0_i32_1 = arith.constant 0 : i32
    return %c0_i32, %c0_i32_0 : i32, i32
  }
  func.func @transform_4(%arg0: i32, %arg1: i32) -> (i32, i32) {
    %c0_i32 = arith.constant 0 : i32
    %c0_i32_0 = arith.constant 0 : i32
    %c0_i32_1 = arith.constant 0 : i32
    return %c0_i32, %c0_i32_0 : i32, i32
  }
  func.func @transform_5(%arg0: i32, %arg1: i32) -> (i32, i32, i32) {
    %c0_i32 = arith.constant 0 : i32
    %c0_i32_0 = arith.constant 0 : i32
    return %arg0, %c0_i32, %arg1 : i32, i32, i32
  }
}

</mosaic_0001>

<llo_original>
// kernel: tpu_custom_call.1
$region0: #{tpu_custom_call.1}
  #allocation0 [shape = 'u32[]', space=smem, size = 0x4, offset = 0x4, fixed_abs, tag = 'smem constant byte address 0x4 - core index']
  #allocation1 [shape = 'u32[144,128]{1,0:T(1,128)}', space=vmem, size = 0x12000, scoped, tag = 'internal scratch']
  %s0 = inlined_call_operand.vmem [shape: f32[2,4,256], index: 0, kind: input, shape index: {}]
  %s1 = inlined_call_operand.vmem [shape: f32[4,4], index: 1, kind: input, shape index: {}]
  %s2 = inlined_call_operand.vmem [shape: f32[4,1], index: 2, kind: input, shape index: {}]
  %s3 = inlined_call_operand.vmem [shape: f32[8,4], index: 3, kind: input, shape index: {}]
  %s4 = inlined_call_operand.vmem [shape: f32[8,1], index: 4, kind: input, shape index: {}]
  %s5 = inlined_call_operand.hbm [shape: f32[2,8,256], index: 5, kind: output, shape index: {}]
  %s6 = sld [smem:[#allocation0]]
  $region94: #{tpu_custom_call.1} parent=0
    _
  %s8 = ssub.s32 1, %s6
  %s9 = scalar_select 0, %s8, %s6
  $region1: #{tpu_custom_call.1} parent=0
    #allocation2 [shape = 'u8[8192]{0}', space=vmem, size = 0x2000, scoped, tag = 'input window, operand 0']
    #allocation3 [shape = 'u8[16384]{0}', space=vmem, size = 0x4000, scoped, tag = 'output window, operand 0']
    #allocation4 [shape = 's32[2]{0}', space=sflag, size = 0x8, scoped, tag = 'scoped memory for tpu_custom_call.1']
    %10 = vsyncpa [#allocation4], 0
    %s11 = scalar_lea.sflag [#allocation4], 1
    %12 = vsyncpa %s11, 0
    loop: start=0, step=1, limit=4
    $region2: #{tpu_custom_call.1} parent=1 // loop_pre_header
      _
    $region3: #{tpu_custom_call.1} parent=1 // loop_header
      %s14 = sphi 0, %s18
      %p15 = scmp.ge.s32.totalorder %s14, 4
      %s21 = sphi 0, %s33
      %s22 = sphi 0, %s29
      %s23 = sphi 0, %s21
      %s24 = sphi 0, %s22
      %s25 = sphi 0, %s23
      %s26 = sphi 0, %s24
      %s38 = sphi 0, %s40
      %s41 = sphi 0, %s38
      %s42 = sphi 0, %s41
      %s58 = sphi 0, %s42
      %s62 = sphi 0, %s62
      %s64 = sphi 0, %s62
      %s65 = sphi 0, %s64
      %s79 = sphi 0, %s65
      %s83 = sphi 0, %s83
      %s85 = sphi 0, %s83
      %s86 = sphi 0, %s85
      %s100 = sphi 0, %s86
      %s104 = sphi 0, %s104
      %s106 = sphi 0, %s104
      %s107 = sphi 0, %s106
      %s121 = sphi 0, %s107
      %s125 = sphi 0, %s125
      %s127 = sphi 0, %s125
      %s128 = sphi 0, %s127
      %s142 = sphi 0, %s128
      %s150 = sphi 0, %s152
      %s153 = sphi 0, %s150
      %s154 = sphi 0, %s153
      %s170 = sphi 0, %s154
    $region4: #{tpu_custom_call.1} parent=1 // loop_header_branch
      %17 = sbr.rel (%p15) target = $region8
    $region5: #{tpu_custom_call.1} parent=1 // loop_body
      %s19 = ssub.s32 %s14, 1
      %s20 = ssub.s32 %s14, 2
      %s27 = sadd.s32 1, %s22
      %p28 = scmp.ge.s32.totalorder %s27, 2
      %s29 = scalar_select %p28, 0, %s27
      %s30 = sadd.s32 1, %s21
      %s31 = scalar_select %p28, %s30, %s21
      %p32 = scmp.ge.s32.totalorder %s31, 1
      %s33 = scalar_select %p32, 0, %s31
      %s34 = ssub.s32 %s21, %s33
      %s35 = ssub.s32 %s22, %s29
      %s36 = sor.u32 %s34, %s35
      %p37 = scmp.eq.s32.totalorder %s36, 0
      %s39 = sadd.s32 %s38, 1
      %s40 = scalar_select %p37, %s38, %s39
      %p43 = pneg %p37
      %p44 = scmp.eq.s32.totalorder %s14, 1
      %p45 = por %p43, %p44
      %p46 = scmp.ne.s32.totalorder %s38, %s41
      %p47 = scmp.eq.s32.totalorder %s14, 0
      %p48 = por %p46, %p47
      %p49 = scmp.ne.s32.totalorder %s38, %s41
      %p50 = scmp.eq.s32.totalorder %s19, 1
      %p51 = por %p49, %p50
      %p52 = scmp.ne.s32.totalorder %s41, %s42
      %p53 = scmp.eq.s32.totalorder %s19, 0
      %p54 = por %p52, %p53
      %p55 = scmp.ne.s32.totalorder %s41, %s42
      %p56 = scmp.eq.s32.totalorder %s20, 1
      %p57 = por %p55, %p56
      %p59 = scmp.ne.s32.totalorder %s42, %s58
      %p60 = scmp.eq.s32.totalorder %s20, 0
      %p61 = por %p59, %p60
      %s63 = sadd.s32 %s62, 1
      %p66 = scmp.eq.s32.totalorder %s14, 1
      %p67 = scmp.ne.s32.totalorder %s62, %s64
      %p68 = scmp.eq.s32.totalorder %s14, 0
      %p69 = por %p67, %p68
      %p70 = scmp.ne.s32.totalorder %s62, %s64
      %p71 = scmp.eq.s32.totalorder %s19, 1
      %p72 = por %p70, %p71
      %p73 = scmp.ne.s32.totalorder %s64, %s65
      %p74 = scmp.eq.s32.totalorder %s19, 0
      %p75 = por %p73, %p74
      %p76 = scmp.ne.s32.totalorder %s64, %s65
      %p77 = scmp.eq.s32.totalorder %s20, 1
      %p78 = por %p76, %p77
      %p80 = scmp.ne.s32.totalorder %s65, %s79
      %p81 = scmp.eq.s32.totalorder %s20, 0
      %p82 = por %p80, %p81
      %s84 = sadd.s32 %s83, 1
      %p87 = scmp.eq.s32.totalorder %s14, 1
      %p88 = scmp.ne.s32.totalorder %s83, %s85
      %p89 = scmp.eq.s32.totalorder %s14, 0
      %p90 = por %p88, %p89
      %p91 = scmp.ne.s32.totalorder %s83, %s85
      %p92 = scmp.eq.s32.totalorder %s19, 1
      %p93 = por %p91, %p92
      %p94 = scmp.ne.s32.totalorder %s85, %s86
      %p95 = scmp.eq.s32.totalorder %s19, 0
      %p96 = por %p94, %p95
      %p97 = scmp.ne.s32.totalorder %s85, %s86
      %p98 = scmp.eq.s32.totalorder %s20, 1
      %p99 = por %p97, %p98
      %p101 = scmp.ne.s32.totalorder %s86, %s100
      %p102 = scmp.eq.s32.totalorder %s20, 0
      %p103 = por %p101, %p102
      %s105 = sadd.s32 %s104, 1
      %p108 = scmp.eq.s32.totalorder %s14, 1
      %p109 = scmp.ne.s32.totalorder %s104, %s106
      %p110 = scmp.eq.s32.totalorder %s14, 0
      %p111 = por %p109, %p110
      %p112 = scmp.ne.s32.totalorder %s104, %s106
      %p113 = scmp.eq.s32.totalorder %s19, 1
      %p114 = por %p112, %p113
      %p115 = scmp.ne.s32.totalorder %s106, %s107
      %p116 = scmp.eq.s32.totalorder %s19, 0
      %p117 = por %p115, %p116
      %p118 = scmp.ne.s32.totalorder %s106, %s107
      %p119 = scmp.eq.s32.totalorder %s20, 1
      %p120 = por %p118, %p119
      %p122 = scmp.ne.s32.totalorder %s107, %s121
      %p123 = scmp.eq.s32.totalorder %s20, 0
      %p124 = por %p122, %p123
      %s126 = sadd.s32 %s125, 1
      %p129 = scmp.eq.s32.totalorder %s14, 1
      %p130 = scmp.ne.s32.totalorder %s125, %s127
      %p131 = scmp.eq.s32.totalorder %s14, 0
      %p132 = por %p130, %p131
      %p133 = scmp.ne.s32.totalorder %s125, %s127
      %p134 = scmp.eq.s32.totalorder %s19, 1
      %p135 = por %p133, %p134
      %p136 = scmp.ne.s32.totalorder %s127, %s128
      %p137 = scmp.eq.s32.totalorder %s19, 0
      %p138 = por %p136, %p137
      %p139 = scmp.ne.s32.totalorder %s127, %s128
      %p140 = scmp.eq.s32.totalorder %s20, 1
      %p141 = por %p139, %p140
      %p143 = scmp.ne.s32.totalorder %s128, %s142
      %p144 = scmp.eq.s32.totalorder %s20, 0
      %p145 = por %p143, %p144
      %s146 = ssub.s32 %s21, %s33
      %s147 = ssub.s32 %s22, %s29
      %s148 = sor.u32 %s146, %s147
      %p149 = scmp.eq.s32.totalorder %s148, 0
      %s151 = sadd.s32 %s150, 1
      %s152 = scalar_select %p149, %s150, %s151
      %p155 = pneg %p149
      %p156 = scmp.eq.s32.totalorder %s14, 1
      %p157 = por %p155, %p156
      %p158 = scmp.ne.s32.totalorder %s150, %s153
      %p159 = scmp.eq.s32.totalorder %s14, 0
      %p160 = por %p158, %p159
      %p161 = scmp.ne.s32.totalorder %s150, %s153
      %p162 = scmp.eq.s32.totalorder %s19, 1
      %p163 = por %p161, %p162
      %p164 = scmp.ne.s32.totalorder %s153, %s154
      %p165 = scmp.eq.s32.totalorder %s19, 0
      %p166 = por %p164, %p165
      %p167 = scmp.ne.s32.totalorder %s153, %s154
      %p168 = scmp.eq.s32.totalorder %s20, 1
      %p169 = por %p167, %p168
      %p171 = scmp.ne.s32.totalorder %s154, %s170
      %p172 = scmp.eq.s32.totalorder %s20, 0
      %p173 = por %p171, %p172
      %p174 = scmp.le.s32.totalorder 1, %s14
      %p175 = scmp.lt.s32.totalorder %s14, 3
      %p176 = pnand %p174, %p175
      %p177 = pneg %p176
      // Predicated region
      $region9: #{tpu_custom_call.1} parent=5 // pred_check
        _
      $region10: #{tpu_custom_call.1} parent=5 // pred_check_branch
        %179 = sbr.rel (%p176) target = $region12
      $region11: #{tpu_custom_call.1} parent=5 // pred_region
        %s180 = ssub.s32 %s14, 1
        // Predicated region
        $region13: #{tpu_custom_call.1} parent=11 // pred_check
          %p181 = pneg %p75
        $region14: #{tpu_custom_call.1} parent=11 // pred_check_branch
          %183 = sbr.rel (%p181) target = $region16
        $region15: #{tpu_custom_call.1} parent=11 // pred_region
          _
        $region16: #{tpu_custom_call.1} parent=11 // pred_fallthru
          _
        // Predicated region
        $region17: #{tpu_custom_call.1} parent=11 // pred_check
          %p184 = pneg %p96
        $region18: #{tpu_custom_call.1} parent=11 // pred_check_branch
          %186 = sbr.rel (%p184) target = $region20
        $region19: #{tpu_custom_call.1} parent=11 // pred_region
          _
        $region20: #{tpu_custom_call.1} parent=11 // pred_fallthru
          _
        // Predicated region
        $region21: #{tpu_custom_call.1} parent=11 // pred_check
          %p187 = pneg %p117
        $region22: #{tpu_custom_call.1} parent=11 // pred_check_branch
          %189 = sbr.rel (%p187) target = $region24
        $region23: #{tpu_custom_call.1} parent=11 // pred_region
          _
        $region24: #{tpu_custom_call.1} parent=11 // pred_fallthru
          _
        // Predicated region
        $region25: #{tpu_custom_call.1} parent=11 // pred_check
          %p190 = pneg %p138
        $region26: #{tpu_custom_call.1} parent=11 // pred_check_branch
          %192 = sbr.rel (%p190) target = $region28
        $region27: #{tpu_custom_call.1} parent=11 // pred_region
          _
        $region28: #{tpu_custom_call.1} parent=11 // pred_fallthru
          _
      $region12: #{tpu_custom_call.1} parent=5 // pred_fallthru
        _
      %p193 = scmp.lt.s32.totalorder %s14, 2
      // Predicated region
      $region29: #{tpu_custom_call.1} parent=5 // pred_check
        %p194 = pneg %p193
      $region30: #{tpu_custom_call.1} parent=5 // pred_check_branch
        %196 = sbr.rel (%p194) target = $region32
      $region31: #{tpu_custom_call.1} parent=5 // pred_region
        // Predicated region
        $region33: #{tpu_custom_call.1} parent=31 // pred_check
          %p197 = pneg %p48
        $region34: #{tpu_custom_call.1} parent=31 // pred_check_branch
          %199 = sbr.rel (%p197) target = $region36
        $region35: #{tpu_custom_call.1} parent=31 // pred_region
          %s200 = sand.u32 %s38, 1
          %s201 = sand.u32 %s38, 1
          %s202 = smul.addr %s201, 8
          %s203 = scalar_lea.vmem [#allocation2], %s202
          %s204 = smul.u32 2, %s21
          %s205 = smul.addr %s204, 2
          %s206 = sadd.s32 %s22, %s205
          %s207 = smul.addr %s206, 4
          %s208 = scalar_lea.vmem %s0, %s207
          // Predicated region
          $region37: #{tpu_custom_call.1} parent=35 // pred_check
            _
          $region38: #{tpu_custom_call.1} parent=35 // pred_check_branch
            %210 = sbr.rel (0) target = $region40
          $region39: #{tpu_custom_call.1} parent=35 // pred_region
            // Predicated region
            $region41: #{tpu_custom_call.1} parent=39 // pred_check
              _
            $region42: #{tpu_custom_call.1} parent=39 // pred_check_branch
              %212 = sbr.rel target = $region44
            $region43: #{tpu_custom_call.1} parent=39 // pred_region
              // Predicated region
              $region56: #{tpu_custom_call.1} parent=43 // pred_check
                _
              $region57: #{tpu_custom_call.1} parent=43 // pred_check_branch
                %229 = sbr.rel (0) target = $region59
              $region58: #{tpu_custom_call.1} parent=43 // pred_region
                loop: start=0, step=1, limit=1
                $region60: #{tpu_custom_call.1} parent=58 // loop_pre_header
                  _
                $region61: #{tpu_custom_call.1} parent=58 // loop_header
                  %s231 = sphi 0, %s235
                  %p232 = scmp.ge.s32.totalorder %s231, 1
                  %s236 = sphi %s208, %s208
                  %s237 = sphi %s203, %s203
                $region62: #{tpu_custom_call.1} parent=58 // loop_header_branch
                  %234 = sbr.rel (%p232) target = $region66
                $region63: #{tpu_custom_call.1} parent=58 // loop_body
                  _
                $region64: #{tpu_custom_call.1} parent=58 // loop_footer
                  %s235 = sadd.s32 1, %s231
                $region65: #{tpu_custom_call.1} parent=58 // loop_footer_branch
                  %230 = sbr.rel target = $region61
                $region66: #{tpu_custom_call.1} parent=58 // loop_exit
                  _
                loop: start=0, step=1, limit=1
                $region67: #{tpu_custom_call.1} parent=58 // loop_pre_header
                  _
                $region68: #{tpu_custom_call.1} parent=58 // loop_header
                  %s240 = sphi 0, %s244
                  %p241 = scmp.ge.s32.totalorder %s240, 1
                  %s245 = sphi %s208, %s208
                  %s246 = sphi %s203, %s203
                $region69: #{tpu_custom_call.1} parent=58 // loop_header_branch
                  %243 = sbr.rel (%p241) target = $region73
                $region70: #{tpu_custom_call.1} parent=58 // loop_body
                  %v247 = vld [vmem:[%s245] sm:$0xf]
                  %248 = vst [vmem:[%s246] sm:$0xf] %v247
                  %v249 = vld [vmem:[%s245 + $0x8] sm:$0xf]
                  %250 = vst [vmem:[%s246 + $0x4] sm:$0xf] %v249
                $region71: #{tpu_custom_call.1} parent=58 // loop_footer
                  %s244 = sadd.s32 1, %s240
                $region72: #{tpu_custom_call.1} parent=58 // loop_footer_branch
                  %239 = sbr.rel target = $region68
                $region73: #{tpu_custom_call.1} parent=58 // loop_exit
                  _
              $region59: #{tpu_custom_call.1} parent=43 // pred_fallthru
                _
            $region44: #{tpu_custom_call.1} parent=39 // pred_fallthru
              _
            // Predicated region
            $region45: #{tpu_custom_call.1} parent=39 // pred_check
              _
            $region46: #{tpu_custom_call.1} parent=39 // pred_check_branch
              %214 = sbr.rel (0) target = $region48
            $region47: #{tpu_custom_call.1} parent=39 // pred_region
              loop: start=0, step=1, limit=1
              $region49: #{tpu_custom_call.1} parent=47 // loop_pre_header
                _
              $region50: #{tpu_custom_call.1} parent=47 // loop_header
                %s217 = sphi 0, %s221
                %p218 = scmp.ge.s32.totalorder %s217, 1
                %s222 = sphi %s208, %s208
                %s223 = sphi %s203, %s203
              $region51: #{tpu_custom_call.1} parent=47 // loop_header_branch
                %220 = sbr.rel (%p218) target = $region55
              $region52: #{tpu_custom_call.1} parent=47 // loop_body
                %v224 = vld [vmem:[%s222] sm:$0xf]
                %225 = vst [vmem:[%s223] sm:$0xf] %v224
                %v226 = vld [vmem:[%s222 + $0x8] sm:$0xf]
                %227 = vst [vmem:[%s223 + $0x4] sm:$0xf] %v226
              $region53: #{tpu_custom_call.1} parent=47 // loop_footer
                %s221 = sadd.s32 1, %s217
              $region54: #{tpu_custom_call.1} parent=47 // loop_footer_branch
                %216 = sbr.rel target = $region50
              $region55: #{tpu_custom_call.1} parent=47 // loop_exit
                _
            $region48: #{tpu_custom_call.1} parent=39 // pred_fallthru
              _
          $region40: #{tpu_custom_call.1} parent=35 // pred_fallthru
            _
          %251 = vnop
        $region36: #{tpu_custom_call.1} parent=31 // pred_fallthru
          _
      $region32: #{tpu_custom_call.1} parent=5 // pred_fallthru
        _
      %p252 = scmp.le.s32.totalorder 1, %s14
      %p253 = scmp.lt.s32.totalorder %s14, 3
      %p254 = pnand %p252, %p253
      %p255 = pneg %p254
      // Predicated region
      $region74: #{tpu_custom_call.1} parent=5 // pred_check
        _
      $region75: #{tpu_custom_call.1} parent=5 // pred_check_branch
        %257 = sbr.rel (%p254) target = $region77
      $region76: #{tpu_custom_call.1} parent=5 // pred_region
        %s258 = ssub.s32 %s14, 1
        %s259 = sand.u32 %s41, 1
        %s260 = sand.u32 %s41, 1
        %s261 = smul.addr %s260, 8
        %s262 = scalar_lea.vmem [#allocation2], %s261
        // Predicated region
        $region78: #{tpu_custom_call.1} parent=76 // pred_check
          %p263 = pneg %p54
        $region79: #{tpu_custom_call.1} parent=76 // pred_check_branch
          %265 = sbr.rel (%p263) target = $region81
        $region80: #{tpu_custom_call.1} parent=76 // pred_region
          _
        $region81: #{tpu_custom_call.1} parent=76 // pred_fallthru
          _
        %s266 = sand.u32 %s41, 1
        %s267 = sand.u32 %s41, 1
        %s268 = smul.addr %s267, 8
        %s269 = scalar_lea.vmem [#allocation2], %s268
        %p270 = pneg %p54
        %p271 = pneg %p51
        %p272 = pneg %p75
        %p273 = pneg %p72
        %p274 = pneg %p96
        %p275 = pneg %p93
        %p276 = pneg %p117
        %p277 = pneg %p114
        %p278 = pneg %p138
        %p279 = pneg %p135
        %p280 = pneg %p166
        %p281 = pneg %p163
        %s282 = sand.u32 %s153, 1
        %s283 = scalar_lea.sflag [#allocation4], %s282
        %s284 = sand.u32 %s153, 1
        %s285 = smul.addr %s284, 16
        %s286 = scalar_lea.vmem [#allocation3], %s285
        %s287 = smul.u32 2, %s23
        %s288 = smul.u32 2, %s23
        %v289 = vld [vmem:[%s1] sm:$0xf]
        %v290 = vld [vmem:[%s2] sm:$0xf]
        %v291 = vld [vmem:[%s3] sm:$0xff]
        %v292 = vld [vmem:[%s4] sm:$0xff]
        %v293 = vld [vmem:[%s262] sm:$0xf]
        %295 = vset.pattern.permute.xlu0 0
        %296 = vperm.xlu0 %295, %v290
        %v297 = vpop.permute.xlu0 %296
        %vm299 = vcmask 31744
        %v301 = vsel %vm299, %v289, 0
        %vm303 = vcmask 1043456
        %v305 = vsel %vm303, %v293, 0
        %307 = vmatprep.subr.mxu0 0.0
        %308 = vmatpush1.msra.mxu0 %v305
        %309 = vmatprep.subr.mxu0 0.0
        %310 = vmatpush1.msra.mxu0 0.0
        %311 = vmatprep.subr.mxu0 0.0
        %312 = vmatpush1.msra.mxu0 0.0
        %313 = vmatprep.subr.mxu0 0.0
        %314 = vmatpush1.msra.mxu0 0.0
        %315 = vmatprep.subr.mxu0 0.0
        %316 = vmatpush1.msra.mxu0 0.0
        %317 = vmatprep.subr.mxu0 0.0
        %318 = vmatpush1.msra.mxu0 0.0
        %319 = vmatprep.subr.mxu0 0.0
        %320 = vmatpush1.msra.mxu0 0.0
        %321 = vmatprep.subr.mxu0 0.0
        %322 = vmatpush1.msra.mxu0 0.0
        %323 = vmatprep.subr.mxu0 0.0
        %324 = vmatpush1.msra.mxu0 0.0
        %325 = vmatprep.subr.mxu0 0.0
        %326 = vmatpush1.msra.mxu0 0.0
        %327 = vmatprep.subr.mxu0 0.0
        %328 = vmatpush1.msra.mxu0 0.0
        %329 = vmatprep.subr.mxu0 0.0
        %330 = vmatpush1.msra.mxu0 0.0
        %331 = vmatprep.subr.mxu0 0.0
        %332 = vmatpush1.msra.mxu0 0.0
        %333 = vmatprep.subr.mxu0 0.0
        %334 = vmatpush1.msra.mxu0 0.0
        %335 = vmatprep.subr.mxu0 0.0
        %336 = vmatpush1.msra.mxu0 0.0
        %337 = vmatprep.subr.mxu0 0.0
        %338 = vmatpush1.msra.mxu0 0.0
        %339 = vmatprep.subr.mxu0 0.0
        %340 = vmatpush1.msra.mxu0 0.0
        %341 = vmatprep.subr.mxu0 0.0
        %342 = vmatpush1.msra.mxu0 0.0
        %343 = vmatprep.subr.mxu0 0.0
        %344 = vmatpush1.msra.mxu0 0.0
        %345 = vmatprep.subr.mxu0 0.0
        %346 = vmatpush1.msra.mxu0 0.0
        %347 = vmatprep.subr.mxu0 0.0
        %348 = vmatpush1.msra.mxu0 0.0
        %349 = vmatprep.subr.mxu0 0.0
        %350 = vmatpush1.msra.mxu0 0.0
        %351 = vmatprep.subr.mxu0 0.0
        %352 = vmatpush1.msra.mxu0 0.0
        %353 = vmatprep.subr.mxu0 0.0
        %354 = vmatpush1.msra.mxu0 0.0
        %355 = vmatprep.subr.mxu0 0.0
        %356 = vmatpush1.msra.mxu0 0.0
        %357 = vmatprep.subr.mxu0 0.0
        %358 = vmatpush1.msra.mxu0 0.0
        %359 = vmatprep.subr.mxu0 0.0
        %360 = vmatpush1.msra.mxu0 0.0
        %361 = vmatprep.subr.mxu0 0.0
        %362 = vmatpush1.msra.mxu0 0.0
        %363 = vmatprep.subr.mxu0 0.0
        %364 = vmatpush1.msra.mxu0 0.0
        %365 = vmatprep.subr.mxu0 0.0
        %366 = vmatpush1.msra.mxu0 0.0
        %367 = vmatprep.subr.mxu0 0.0
        %368 = vmatpush1.msra.mxu0 0.0
        %369 = vmatprep.subr.mxu0 0.0
        %370 = vmatpush1.msra.mxu0 0.0
        %371 = vmatprep.mubr.f32.mxu0 0.0
        %372 = vmatmul.mubr.f32.gmra.mrb[0].mxu0 %v301
        %v373 = vpop.f32.mrb[0].mxu0
        %v374 = vadd.f32 %v297, %v373
        %v375 = vpop.f32.mrb[0].mxu0
        %376 = vdwg.mxu0
        %v377 = vmul.f32 %v374, 0.5
        %v378 = vmul.f32 %v374, 0.70710677
        %v379 = verf.f32.pop %v378
        %v380 = vadd.f32 %v379, 1.0
        %v381 = vmul.f32 %v377, %v380
        %383 = vset.pattern.permute.xlu0 0
        %384 = vperm.xlu0 %383, %v292
        %v385 = vpop.permute.xlu0 %384
        %v388 = vsel %vm299, %v291, 0
        %v391 = vsel %vm303, %v381, 0
        %393 = vmatprep.subr.mxu0 0.0
        %394 = vmatpush1.msra.mxu0 %v391
        %395 = vmatprep.subr.mxu0 0.0
        %396 = vmatpush1.msra.mxu0 0.0
        %397 = vmatprep.subr.mxu0 0.0
        %398 = vmatpush1.msra.mxu0 0.0
        %399 = vmatprep.subr.mxu0 0.0
        %400 = vmatpush1.msra.mxu0 0.0
        %401 = vmatprep.subr.mxu0 0.0
        %402 = vmatpush1.msra.mxu0 0.0
        %403 = vmatprep.subr.mxu0 0.0
        %404 = vmatpush1.msra.mxu0 0.0
        %405 = vmatprep.subr.mxu0 0.0
        %406 = vmatpush1.msra.mxu0 0.0
        %407 = vmatprep.subr.mxu0 0.0
        %408 = vmatpush1.msra.mxu0 0.0
        %409 = vmatprep.subr.mxu0 0.0
        %410 = vmatpush1.msra.mxu0 0.0
        %411 = vmatprep.subr.mxu0 0.0
        %412 = vmatpush1.msra.mxu0 0.0
        %413 = vmatprep.subr.mxu0 0.0
        %414 = vmatpush1.msra.mxu0 0.0
        %415 = vmatprep.subr.mxu0 0.0
        %416 = vmatpush1.msra.mxu0 0.0
        %417 = vmatprep.subr.mxu0 0.0
        %418 = vmatpush1.msra.mxu0 0.0
        %419 = vmatprep.subr.mxu0 0.0
        %420 = vmatpush1.msra.mxu0 0.0
        %421 = vmatprep.subr.mxu0 0.0
        %422 = vmatpush1.msra.mxu0 0.0
        %423 = vmatprep.subr.mxu0 0.0
        %424 = vmatpush1.msra.mxu0 0.0
        %425 = vmatprep.subr.mxu0 0.0
        %426 = vmatpush1.msra.mxu0 0.0
        %427 = vmatprep.subr.mxu0 0.0
        %428 = vmatpush1.msra.mxu0 0.0
        %429 = vmatprep.subr.mxu0 0.0
        %430 = vmatpush1.msra.mxu0 0.0
        %431 = vmatprep.subr.mxu0 0.0
        %432 = vmatpush1.msra.mxu0 0.0
        %433 = vmatprep.subr.mxu0 0.0
        %434 = vmatpush1.msra.mxu0 0.0
        %435 = vmatprep.subr.mxu0 0.0
        %436 = vmatpush1.msra.mxu0 0.0
        %437 = vmatprep.subr.mxu0 0.0
        %438 = vmatpush1.msra.mxu0 0.0
        %439 = vmatprep.subr.mxu0 0.0
        %440 = vmatpush1.msra.mxu0 0.0
        %441 = vmatprep.subr.mxu0 0.0
        %442 = vmatpush1.msra.mxu0 0.0
        %443 = vmatprep.subr.mxu0 0.0
        %444 = vmatpush1.msra.mxu0 0.0
        %445 = vmatprep.subr.mxu0 0.0
        %446 = vmatpush1.msra.mxu0 0.0
        %447 = vmatprep.subr.mxu0 0.0
        %448 = vmatpush1.msra.mxu0 0.0
        %449 = vmatprep.subr.mxu0 0.0
        %450 = vmatpush1.msra.mxu0 0.0
        %451 = vmatprep.subr.mxu0 0.0
        %452 = vmatpush1.msra.mxu0 0.0
        %453 = vmatprep.subr.mxu0 0.0
        %454 = vmatpush1.msra.mxu0 0.0
        %455 = vmatprep.subr.mxu0 0.0
        %456 = vmatpush1.msra.mxu0 0.0
        %457 = vmatprep.mubr.f32.mxu0 0.0
        %458 = vmatmul.mubr.f32.gmra.mrb[0].mxu0 %v388
        %v459 = vpop.f32.mrb[0].mxu0
        %v460 = vadd.f32 %v385, %v459
        %v461 = vpop.f32.mrb[0].mxu0
        %462 = vdwg.mxu0
        %463 = vst [vmem:[%s286] sm:$0xff] %v460
        %s464 = scalar_lea.vmem %s262, 4 [#allocation2]
        %v465 = vld [vmem:[%s464] sm:$0xf]
        %v467 = vsel %vm303, %v465, 0
        %469 = vmatprep.subr.mxu0 0.0
        %470 = vmatpush1.msra.mxu0 %v467
        %471 = vmatprep.subr.mxu0 0.0
        %472 = vmatpush1.msra.mxu0 0.0
        %473 = vmatprep.subr.mxu0 0.0
        %474 = vmatpush1.msra.mxu0 0.0
        %475 = vmatprep.subr.mxu0 0.0
        %476 = vmatpush1.msra.mxu0 0.0
        %477 = vmatprep.subr.mxu0 0.0
        %478 = vmatpush1.msra.mxu0 0.0
        %479 = vmatprep.subr.mxu0 0.0
        %480 = vmatpush1.msra.mxu0 0.0
        %481 = vmatprep.subr.mxu0 0.0
        %482 = vmatpush1.msra.mxu0 0.0
        %483 = vmatprep.subr.mxu0 0.0
        %484 = vmatpush1.msra.mxu0 0.0
        %485 = vmatprep.subr.mxu0 0.0
        %486 = vmatpush1.msra.mxu0 0.0
        %487 = vmatprep.subr.mxu0 0.0
        %488 = vmatpush1.msra.mxu0 0.0
        %489 = vmatprep.subr.mxu0 0.0
        %490 = vmatpush1.msra.mxu0 0.0
        %491 = vmatprep.subr.mxu0 0.0
        %492 = vmatpush1.msra.mxu0 0.0
        %493 = vmatprep.subr.mxu0 0.0
        %494 = vmatpush1.msra.mxu0 0.0
        %495 = vmatprep.subr.mxu0 0.0
        %496 = vmatpush1.msra.mxu0 0.0
        %497 = vmatprep.subr.mxu0 0.0
        %498 = vmatpush1.msra.mxu0 0.0
        %499 = vmatprep.subr.mxu0 0.0
        %500 = vmatpush1.msra.mxu0 0.0
        %501 = vmatprep.subr.mxu0 0.0
        %502 = vmatpush1.msra.mxu0 0.0
        %503 = vmatprep.subr.mxu0 0.0
        %504 = vmatpush1.msra.mxu0 0.0
        %505 = vmatprep.subr.mxu0 0.0
        %506 = vmatpush1.msra.mxu0 0.0
        %507 = vmatprep.subr.mxu0 0.0
        %508 = vmatpush1.msra.mxu0 0.0
        %509 = vmatprep.subr.mxu0 0.0
        %510 = vmatpush1.msra.mxu0 0.0
        %511 = vmatprep.subr.mxu0 0.0
        %512 = vmatpush1.msra.mxu0 0.0
        %513 = vmatprep.subr.mxu0 0.0
        %514 = vmatpush1.msra.mxu0 0.0
        %515 = vmatprep.subr.mxu0 0.0
        %516 = vmatpush1.msra.mxu0 0.0
        %517 = vmatprep.subr.mxu0 0.0
        %518 = vmatpush1.msra.mxu0 0.0
        %519 = vmatprep.subr.mxu0 0.0
        %520 = vmatpush1.msra.mxu0 0.0
        %521 = vmatprep.subr.mxu0 0.0
        %522 = vmatpush1.msra.mxu0 0.0
        %523 = vmatprep.subr.mxu0 0.0
        %524 = vmatpush1.msra.mxu0 0.0
        %525 = vmatprep.subr.mxu0 0.0
        %526 = vmatpush1.msra.mxu0 0.0
        %527 = vmatprep.subr.mxu0 0.0
        %528 = vmatpush1.msra.mxu0 0.0
        %529 = vmatprep.subr.mxu0 0.0
        %530 = vmatpush1.msra.mxu0 0.0
        %531 = vmatprep.subr.mxu0 0.0
        %532 = vmatpush1.msra.mxu0 0.0
        %533 = vmatprep.mubr.f32.mxu0 0.0
        %534 = vmatmul.mubr.f32.gmra.mrb[0].mxu0 %v301
        %v535 = vpop.f32.mrb[0].mxu0
        %v536 = vadd.f32 %v297, %v535
        %v537 = vpop.f32.mrb[0].mxu0
        %538 = vdwg.mxu0
        %v539 = vmul.f32 %v536, 0.5
        %v540 = vmul.f32 %v536, 0.70710677
        %v541 = verf.f32.pop %v540
        %v542 = vadd.f32 %v541, 1.0
        %v543 = vmul.f32 %v539, %v542
        %v545 = vsel %vm303, %v543, 0
        %547 = vmatprep.subr.mxu0 0.0
        %548 = vmatpush1.msra.mxu0 %v545
        %549 = vmatprep.subr.mxu0 0.0
        %550 = vmatpush1.msra.mxu0 0.0
        %551 = vmatprep.subr.mxu0 0.0
        %552 = vmatpush1.msra.mxu0 0.0
        %553 = vmatprep.subr.mxu0 0.0
        %554 = vmatpush1.msra.mxu0 0.0
        %555 = vmatprep.subr.mxu0 0.0
        %556 = vmatpush1.msra.mxu0 0.0
        %557 = vmatprep.subr.mxu0 0.0
        %558 = vmatpush1.msra.mxu0 0.0
        %559 = vmatprep.subr.mxu0 0.0
        %560 = vmatpush1.msra.mxu0 0.0
        %561 = vmatprep.subr.mxu0 0.0
        %562 = vmatpush1.msra.mxu0 0.0
        %563 = vmatprep.subr.mxu0 0.0
        %564 = vmatpush1.msra.mxu0 0.0
        %565 = vmatprep.subr.mxu0 0.0
        %566 = vmatpush1.msra.mxu0 0.0
        %567 = vmatprep.subr.mxu0 0.0
        %568 = vmatpush1.msra.mxu0 0.0
        %569 = vmatprep.subr.mxu0 0.0
        %570 = vmatpush1.msra.mxu0 0.0
        %571 = vmatprep.subr.mxu0 0.0
        %572 = vmatpush1.msra.mxu0 0.0
        %573 = vmatprep.subr.mxu0 0.0
        %574 = vmatpush1.msra.mxu0 0.0
        %575 = vmatprep.subr.mxu0 0.0
        %576 = vmatpush1.msra.mxu0 0.0
        %577 = vmatprep.subr.mxu0 0.0
        %578 = vmatpush1.msra.mxu0 0.0
        %579 = vmatprep.subr.mxu0 0.0
        %580 = vmatpush1.msra.mxu0 0.0
        %581 = vmatprep.subr.mxu0 0.0
        %582 = vmatpush1.msra.mxu0 0.0
        %583 = vmatprep.subr.mxu0 0.0
        %584 = vmatpush1.msra.mxu0 0.0
        %585 = vmatprep.subr.mxu0 0.0
        %586 = vmatpush1.msra.mxu0 0.0
        %587 = vmatprep.subr.mxu0 0.0
        %588 = vmatpush1.msra.mxu0 0.0
        %589 = vmatprep.subr.mxu0 0.0
        %590 = vmatpush1.msra.mxu0 0.0
        %591 = vmatprep.subr.mxu0 0.0
        %592 = vmatpush1.msra.mxu0 0.0
        %593 = vmatprep.subr.mxu0 0.0
        %594 = vmatpush1.msra.mxu0 0.0
        %595 = vmatprep.subr.mxu0 0.0
        %596 = vmatpush1.msra.mxu0 0.0
        %597 = vmatprep.subr.mxu0 0.0
        %598 = vmatpush1.msra.mxu0 0.0
        %599 = vmatprep.subr.mxu0 0.0
        %600 = vmatpush1.msra.mxu0 0.0
        %601 = vmatprep.subr.mxu0 0.0
        %602 = vmatpush1.msra.mxu0 0.0
        %603 = vmatprep.subr.mxu0 0.0
        %604 = vmatpush1.msra.mxu0 0.0
        %605 = vmatprep.subr.mxu0 0.0
        %606 = vmatpush1.msra.mxu0 0.0
        %607 = vmatprep.subr.mxu0 0.0
        %608 = vmatpush1.msra.mxu0 0.0
        %609 = vmatprep.subr.mxu0 0.0
        %610 = vmatpush1.msra.mxu0 0.0
        %611 = vmatprep.mubr.f32.mxu0 0.0
        %612 = vmatmul.mubr.f32.gmra.mrb[0].mxu0 %v388
        %v613 = vpop.f32.mrb[0].mxu0
        %v614 = vadd.f32 %v385, %v613
        %v615 = vpop.f32.mrb[0].mxu0
        %616 = vdwg.mxu0
        %s617 = scalar_lea.vmem %s286, 8 [#allocation3]
        %618 = vst [vmem:[%s617] sm:$0xff] %v614
        %s619 = sand.u32 %s153, 1
        %s620 = scalar_lea.sflag [#allocation4], %s619
        %s621 = sand.u32 %s153, 1
        %s622 = smul.addr %s621, 16
        %s623 = scalar_lea.vmem [#allocation3], %s622
        // Predicated region
        $region82: #{tpu_custom_call.1} parent=76 // pred_check
          %p624 = pneg %p163
        $region83: #{tpu_custom_call.1} parent=76 // pred_check_branch
          %626 = sbr.rel (%p624) target = $region85
        $region84: #{tpu_custom_call.1} parent=76 // pred_region
          %s627 = smul.u32 2, %s23
          %s629 = ssub.s32 256, 256
          %630 = vsyncadd %s620, %s629
          %s631 = smul.addr %s627, 2
          %s632 = sadd.s32 %s24, %s631
          %s633 = smul.addr %s632, 128
          %s634 = scalar_lea.hbm %s5, %s633
          %s635 = sshll.u32 %s623, 4
          %s636 = int_to_ptr.vmem [resolvable:$true] %s635
          %641 = dma.vmem_to_hbm [thread:$0]  %s636, 256, %s634, %s620, 128, 256, 8
        $region85: #{tpu_custom_call.1} parent=76 // pred_fallthru
          _
      $region77: #{tpu_custom_call.1} parent=5 // pred_fallthru
        _
      %p642 = scmp.le.s32.totalorder 2, %s14
      // Predicated region
      $region86: #{tpu_custom_call.1} parent=5 // pred_check
        %p643 = pneg %p642
      $region87: #{tpu_custom_call.1} parent=5 // pred_check_branch
        %645 = sbr.rel (%p643) target = $region89
      $region88: #{tpu_custom_call.1} parent=5 // pred_region
        %s646 = ssub.s32 %s14, 2
        // Predicated region
        $region90: #{tpu_custom_call.1} parent=88 // pred_check
          %p647 = pneg %p169
        $region91: #{tpu_custom_call.1} parent=88 // pred_check_branch
          %649 = sbr.rel (%p647) target = $region93
        $region92: #{tpu_custom_call.1} parent=88 // pred_region
          %s650 = sand.u32 %s154, 1
          %s651 = scalar_lea.sflag [#allocation4], %s650
          %s652 = sand.u32 %s154, 1
          %s653 = smul.addr %s652, 16
          %s654 = scalar_lea.vmem [#allocation3], %s653
          %655 = dma.done %s651, 256
        $region93: #{tpu_custom_call.1} parent=88 // pred_fallthru
          _
      $region89: #{tpu_custom_call.1} parent=5 // pred_fallthru
        _
    $region6: #{tpu_custom_call.1} parent=1 // loop_footer
      %s18 = sadd.s32 1, %s14
    $region7: #{tpu_custom_call.1} parent=1 // loop_footer_branch
      %13 = sbr.rel target = $region3
    $region8: #{tpu_custom_call.1} parent=1 // loop_exit
      _
    %656 = vsyncpa [#allocation4], 1
    %s657 = scalar_lea.sflag [#allocation4], 1
    %658 = vsyncpa %s657, 1

</llo_original>
